<compile_context>
chip_gen: v7x
topology: tpu7x:2x2x1
jax: 0.10.0
libtpu: 0.0.40
codegen_flags: <defaults>
</compile_context>

<pallas_src>
import math

import jax
import jax.numpy as jnp
from jax.experimental import pallas as pl
from jax.experimental.pallas import tpu as pltpu

C = 128  # fixed by the module: Conv1d(128, 128, 1)


def upsample_kernel(x_dn_ref, x_up_ref, wdn_ref, wskip_ref, out_ref, kv_ref):
    """One (batch, query-row-tile) grid step.

    x_dn_ref : (1, C, M)   pcd_down for this batch (constant across row tiles)
    x_up_ref : (1, C, TQ)  query-row tile of pcd_up
    wdn_ref  : (2C, C)     stacked [Wqk_scaled; Wv]
    wskip_ref: (C, C)      skip-link weight
    out_ref  : (1, C, TQ)
    kv_ref   : VMEM scratch (2C, M) holding [k'; v] for the current batch
    """
    # Project pcd_down once per batch (first row tile only); kv_ref persists
    # across the row-tile grid axis.
    @pl.when(pl.program_id(1) == 0)
    def _():
        kv_ref[...] = jnp.dot(
            wdn_ref[...], x_dn_ref[0], preferred_element_type=jnp.float32
        )  # (2C, M)

    xu = x_up_ref[0]                 # (C, TQ)
    k = kv_ref[:C, :]                # (C, M)  — scale 1/sqrt(C) already folded in
    v = kv_ref[C:, :]                # (C, M)

    # energy = xu^T @ k  (contract channel dim with channel dim, no explicit .T)
    energy = jax.lax.dot_general(
        xu, k, (((0,), (0,)), ((), ())), preferred_element_type=jnp.float32
    )                                # (TQ, M)

    # numerically stable softmax over the M (key) axis
    e = energy - jnp.max(energy, axis=-1, keepdims=True)
    p = jnp.exp(e)
    inv = pl.reciprocal(jnp.sum(p, axis=-1, keepdims=True), approx=True)
    attn = p * inv                   # (TQ, M)

    # (attention @ v^T)^T == v @ attention^T -> (C, TQ), directly in output layout
    av = jax.lax.dot_general(
        v, attn, (((1,), (1,)), ((), ())), preferred_element_type=jnp.float32
    )                                # (C, TQ)

    skip = jnp.dot(wskip_ref[...], xu, preferred_element_type=jnp.float32)  # (C, TQ)

    out_ref[0] = (skip + av).astype(out_ref.dtype)


def upsample(pcd_up, pcd_dn, wq, wk, wv, wskip, *, tq=None):
    """Forward pass of the APES UpSample module."""
    B, Cu, N = pcd_up.shape
    Bd, Cd, M = pcd_dn.shape
    assert Cu == C and Cd == C and Bd == B

    # Fold the 1/sqrt(C) softmax scale into Wqk = Wq^T @ Wk, stack with Wv so
    # the pcd_down projection is a single (2C, C) @ (C, M) MXU matmul.
    scale = 1.0 / math.sqrt(float(C))  # sqrt(q.shape[-2]) with q in (B, C, N)
    wqk = jnp.dot(wq.T, wk) * scale                      # (C, C)
    wdn = jnp.concatenate([wqk, wv], axis=0)             # (2C, C)

    # Query-row tile: multiple of 128 for lane-dense loads/stores when possible;
    # fall back to a single full tile for small / unaligned N (test path).
    if tq is None:
        if N % 256 == 0:
            tq = 256
        elif N % 128 == 0:
            tq = 128
        else:
            tq = N
    assert N % tq == 0
    n_tiles = N // tq

    out = pl.pallas_call(
        upsample_kernel,
        out_shape=jax.ShapeDtypeStruct((B, C, N), jnp.float32),
        grid=(B, n_tiles),
        in_specs=[
            pl.BlockSpec((1, C, M), lambda b, j: (b, 0, 0)),   # pcd_down (per batch)
            pl.BlockSpec((1, C, tq), lambda b, j: (b, 0, j)),  # pcd_up row tile
            pl.BlockSpec((2 * C, C), lambda b, j: (0, 0)),     # stacked [Wqk; Wv]
            pl.BlockSpec((C, C), lambda b, j: (0, 0)),         # Wskip
        ],
        out_specs=pl.BlockSpec((1, C, tq), lambda b, j: (b, 0, j)),
        scratch_shapes=[pltpu.VMEM((2 * C, M), jnp.float32)],  # per-batch [k'; v]
        compiler_params=pltpu.CompilerParams(
            # batch axis parallel (v7x 2-TC sharding), row-tile axis sequential
            # so the per-batch kv scratch init via pl.when(j == 0) is valid.
            dimension_semantics=("parallel", "arbitrary"),
        ),
    )(pcd_dn, pcd_up, wdn, wskip)
    return out


def upsample_reference(pcd_up, pcd_dn, wq, wk, wv, wskip):
    """Pure-JAX reference matching the PyTorch module."""
    q = jnp.einsum("oc,bcn->bon", wq, pcd_up)
    k = jnp.einsum("oc,bcm->bom", wk, pcd_dn)
    v = jnp.einsum("oc,bcm->bom", wv, pcd_dn)
    energy = jnp.einsum("bcn,bcm->bnm", q, k) / math.sqrt(q.shape[-2])
    attn = jax.nn.softmax(energy, axis=-1)
    x = jnp.einsum("bnm,bcm->bcn", attn, v)
    return jnp.einsum("oc,bcn->bon", wskip, pcd_up) + x


if __name__ == "__main__":
    B, N, M = 2, 16, 8  # small test shapes; C = 128 is fixed by the module
    key = jax.random.PRNGKey(0)
    k_up, k_dn, kq, kk, kv_, ks = jax.random.split(key, 6)

    pcd_up = jax.random.normal(k_up, (B, C, N), dtype=jnp.float32)
    pcd_dn = jax.random.normal(k_dn, (B, C, M), dtype=jnp.float32)

    # Conv1d(128, 128, 1, bias=False) weights, (out, in), PyTorch-style init.
    bound = 1.0 / math.sqrt(C)
    wq = jax.random.uniform(kq, (C, C), jnp.float32, -bound, bound)
    wk = jax.random.uniform(kk, (C, C), jnp.float32, -bound, bound)
    wv = jax.random.uniform(kv_, (C, C), jnp.float32, -bound, bound)
    wskip = jax.random.uniform(ks, (C, C), jnp.float32, -bound, bound)

    out = upsample(pcd_up, pcd_dn, wq, wk, wv, wskip)
    out = jax.block_until_ready(out)
    assert out.shape == (B, C, N)

    ref = upsample_reference(pcd_up, pcd_dn, wq, wk, wv, wskip)
    assert jnp.allclose(out, ref, rtol=5e-3, atol=5e-3), float(
        jnp.max(jnp.abs(out - ref))
    )
    print("KERNEL_OK")
</pallas_src>

<mosaic_0001>
module attributes {stable_mosaic.version = 11 : i64} {
  func.func @upsample_kernel(%arg0: i32, %arg1: i32, %arg2: memref<1x128x8xf32, #tpu.memory_space<vmem>>, %arg3: memref<1x128x16xf32, #tpu.memory_space<vmem>>, %arg4: memref<256x128xf32, #tpu.memory_space<vmem>>, %arg5: memref<128x128xf32, #tpu.memory_space<vmem>>, %arg6: memref<1x128x16xf32, #tpu.memory_space<vmem>>, %arg7: memref<256x8xf32, #tpu.memory_space<vmem>>) attributes {dimension_semantics = [#tpu.dimension_semantics<parallel>, #tpu.dimension_semantics<arbitrary>], iteration_bounds = array<i64: 2, 1>, scalar_prefetch = 0 : i64, scratch_operands = 1 : i64, tpu.core_type = #tpu.core_type<tc>, window_params = [{transform_indices = @transform_0, window_bounds = array<i64: 1, 128, 8>}, {transform_indices = @transform_1, window_bounds = array<i64: 1, 128, 16>}, {pipeline_mode = #tpu.pipeline_mode<synchronous>, transform_indices = @transform_2, window_bounds = array<i64: 256, 128>}, {pipeline_mode = #tpu.pipeline_mode<synchronous>, transform_indices = @transform_3, window_bounds = array<i64: 128, 128>}, {transform_indices = @transform_4, window_bounds = array<i64: 1, 128, 16>}]} {
    %c0_i32 = arith.constant 0 : i32
    %0 = arith.cmpi eq, %arg1, %c0_i32 : i32
    %1 = arith.extui %0 : i1 to i32
    %c0_i32_0 = arith.constant 0 : i32
    %2 = arith.cmpi ne, %1, %c0_i32_0 : i32
    scf.if %2 {
      %c0_15 = arith.constant 0 : index
      %c0_16 = arith.constant 0 : index
      %25 = vector.load %arg4[%c0_15, %c0_16] : memref<256x128xf32, #tpu.memory_space<vmem>>, vector<256x128xf32>
      %c0_17 = arith.constant 0 : index
      %c0_18 = arith.constant 0 : index
      %c0_19 = arith.constant 0 : index
      %26 = vector.load %arg2[%c0_17, %c0_18, %c0_19] : memref<1x128x8xf32, #tpu.memory_space<vmem>>, vector<1x128x8xf32>
      %27 = vector.shape_cast %26 : vector<1x128x8xf32> to vector<128x8xf32>
      %cst_20 = arith.constant dense<0.000000e+00> : vector<256x8xf32>
      %28 = tpu.matmul %25, %27, %cst_20 {dimension_numbers = #tpu.dot_dimension_numbers<[1], [0], [0], [1], [0, 0, 1, 1], [], []>} : vector<256x128xf32>, vector<128x8xf32>, vector<256x8xf32> -> vector<256x8xf32>
      %c0_21 = arith.constant 0 : index
      %c0_22 = arith.constant 0 : index
      %29 = vector.load %arg7[%c0_21, %c0_22] : memref<256x8xf32, #tpu.memory_space<vmem>>, vector<256x8xf32>
      tpu.vector_store %arg7[%c0_21, %c0_22], %28 {strides = array<i32>} : memref<256x8xf32, #tpu.memory_space<vmem>>, vector<256x8xf32>,
    } else {
    }
    %c0 = arith.constant 0 : index
    %c0_1 = arith.constant 0 : index
    %c0_2 = arith.constant 0 : index
    %3 = vector.load %arg3[%c0, %c0_1, %c0_2] : memref<1x128x16xf32, #tpu.memory_space<vmem>>, vector<1x128x16xf32>
    %4 = vector.shape_cast %3 : vector<1x128x16xf32> to vector<128x16xf32>
    %c0_3 = arith.constant 0 : index
    %c0_4 = arith.constant 0 : index
    %5 = vector.load %arg7[%c0_3, %c0_4] : memref<256x8xf32, #tpu.memory_space<vmem>>, vector<128x8xf32>
    %c128 = arith.constant 128 : index
    %c0_5 = arith.constant 0 : index
    %6 = vector.load %arg7[%c128, %c0_5] : memref<256x8xf32, #tpu.memory_space<vmem>>, vector<128x8xf32>
    %cst = arith.constant dense<0.000000e+00> : vector<16x8xf32>
    %7 = tpu.matmul %4, %5, %cst {dimension_numbers = #tpu.dot_dimension_numbers<[0], [0], [1], [1], [0, 1, 1, 1], [], []>} : vector<128x16xf32>, vector<128x8xf32>, vector<16x8xf32> -> vector<16x8xf32>
    %cst_6 = arith.constant dense<0xFF800000> : vector<16xf32>
    %8 = vector.multi_reduction <maximumf>, %7, %cst_6 [1] : vector<16x8xf32> to vector<16xf32>
    %9 = vector.shape_cast %8 : vector<16xf32> to vector<16x1xf32>
    %10 = vector.broadcast %9 : vector<16x1xf32> to vector<16x8xf32>
    %11 = arith.subf %7, %10 : vector<16x8xf32>
    %12 = math.exp %11 : vector<16x8xf32>
    %cst_7 = arith.constant dense<0.000000e+00> : vector<16xf32>
    %13 = vector.multi_reduction <add>, %12, %cst_7 [1] : vector<16x8xf32> to vector<16xf32>
    %14 = vector.shape_cast %13 : vector<16xf32> to vector<16x1xf32>
    %15 = tpu.reciprocal %14 {approx = true} : vector<16x1xf32> -> vector<16x1xf32>
    %16 = vector.broadcast %15 : vector<16x1xf32> to vector<16x8xf32>
    %17 = arith.mulf %12, %16 : vector<16x8xf32>
    %cst_8 = arith.constant dense<0.000000e+00> : vector<128x16xf32>
    %18 = tpu.matmul %6, %17, %cst_8 {dimension_numbers = #tpu.dot_dimension_numbers<[1], [1], [0], [0], [0, 0, 1, 0], [], []>} : vector<128x8xf32>, vector<16x8xf32>, vector<128x16xf32> -> vector<128x16xf32>
    %c0_9 = arith.constant 0 : index
    %c0_10 = arith.constant 0 : index
    %19 = vector.load %arg5[%c0_9, %c0_10] : memref<128x128xf32, #tpu.memory_space<vmem>>, vector<128x128xf32>
    %cst_11 = arith.constant dense<0.000000e+00> : vector<128x16xf32>
    %20 = tpu.matmul %19, %4, %cst_11 {dimension_numbers = #tpu.dot_dimension_numbers<[1], [0], [0], [1], [0, 0, 1, 1], [], []>} : vector<128x128xf32>, vector<128x16xf32>, vector<128x16xf32> -> vector<128x16xf32>
    %21 = arith.addf %20, %18 : vector<128x16xf32>
    %c0_12 = arith.constant 0 : index
    %c0_13 = arith.constant 0 : index
    %c0_14 = arith.constant 0 : index
    %22 = vector.load %arg6[%c0_12, %c0_13, %c0_14] : memref<1x128x16xf32, #tpu.memory_space<vmem>>, vector<1x128x16xf32>
    %23 = vector.shape_cast %22 : vector<1x128x16xf32> to vector<128x16xf32>
    %24 = vector.shape_cast %21 : vector<128x16xf32> to vector<1x128x16xf32>
    tpu.vector_store %arg6[%c0_12, %c0_13, %c0_14], %24 {strides = array<i32>} : memref<1x128x16xf32, #tpu.memory_space<vmem>>, vector<1x128x16xf32>,
    return
  }
  func.func @transform_0(%arg0: i32, %arg1: i32) -> (i32, i32, i32) {
    %c0_i32 = arith.constant 0 : i32
    %c0_i32_0 = arith.constant 0 : i32
    %c0_i32_1 = arith.constant 0 : i32
    return %arg0, %c0_i32, %c0_i32_0 : i32, i32, i32
  }
  func.func @transform_1(%arg0: i32, %arg1: i32) -> (i32, i32, i32) {
    %c0_i32 = arith.constant 0 : i32
    %c0_i32_0 = arith.constant 0 : i32
    return %arg0, %c0_i32, %arg1 : i32, i32, i32
  }
  func.func @transform_2(%arg0: i32, %arg1: i32) -> (i32, i32) {
    %c0_i32 = arith.constant 0 : i32
    %c0_i32_0 = arith.constant 0 : i32
    %c0_i32_1 = arith.constant 0 : i32
    return %c0_i32, %c0_i32_0 : i32, i32
  }
  func.func @transform_3(%arg0: i32, %arg1: i32) -> (i32, i32) {
    %c0_i32 = arith.constant 0 : i32
    %c0_i32_0 = arith.constant 0 : i32
    %c0_i32_1 = arith.constant 0 : i32
    return %c0_i32, %c0_i32_0 : i32, i32
  }
  func.func @transform_4(%arg0: i32, %arg1: i32) -> (i32, i32, i32) {
    %c0_i32 = arith.constant 0 : i32
    %c0_i32_0 = arith.constant 0 : i32
    return %arg0, %c0_i32, %arg1 : i32, i32, i32
  }
}

</mosaic_0001>

<llo_original>
// kernel: tpu_custom_call.1
$region0: #{tpu_custom_call.1}
  #allocation0 [shape = 'u32[]', space=smem, size = 0x4, offset = 0x4, fixed_abs, tag = 'smem constant byte address 0x4 - core index']
  #allocation1 [shape = 'u32[144,128]{1,0:T(1,128)}', space=vmem, size = 0x12000, scoped, tag = 'internal scratch']
  #allocation2 [shape = 'f32[256,8]{1,0:T(8,128)}', space=vmem, size = 0x20000, scoped, tag = 'scratch operand']
  %s0 = inlined_call_operand.vmem [shape: f32[2,128,8], index: 0, kind: input, shape index: {}]
  %s1 = inlined_call_operand.vmem [shape: f32[2,128,16], index: 1, kind: input, shape index: {}]
  %s2 = inlined_call_operand.vmem [shape: f32[256,128], index: 2, kind: input, shape index: {}]
  %s3 = inlined_call_operand.vmem [shape: f32[128,128], index: 3, kind: input, shape index: {}]
  %s4 = inlined_call_operand.vmem [shape: f32[2,128,16], index: 4, kind: output, shape index: {}]
  %s5 = sld [smem:[#allocation0]]
  $region53: #{tpu_custom_call.1} parent=0
    _
  %s7 = ssub.s32 1, %s5
  %s8 = scalar_select 0, %s7, %s5
  loop: start=0, step=1, limit=4
  $region2: #{tpu_custom_call.1} parent=0 // loop_pre_header
    _
  $region3: #{tpu_custom_call.1} parent=0 // loop_header
    %s10 = sphi 0, %s14
    %p11 = scmp.ge.s32.totalorder %s10, 4
    %s17 = sphi 0, %s29
    %s18 = sphi 0, %s25
    %s19 = sphi 0, %s17
    %s20 = sphi 0, %s18
    %s21 = sphi 0, %s19
    %s22 = sphi 0, %s20
    %s32 = sphi 0, %s34
    %s35 = sphi 0, %s32
    %s36 = sphi 0, %s35
    %s52 = sphi 0, %s36
    %s60 = sphi 0, %s62
    %s63 = sphi 0, %s60
    %s64 = sphi 0, %s63
    %s80 = sphi 0, %s64
    %s84 = sphi 0, %s84
    %s86 = sphi 0, %s84
    %s87 = sphi 0, %s86
    %s101 = sphi 0, %s87
    %s105 = sphi 0, %s105
    %s107 = sphi 0, %s105
    %s108 = sphi 0, %s107
    %s122 = sphi 0, %s108
    %s130 = sphi 0, %s132
    %s133 = sphi 0, %s130
    %s134 = sphi 0, %s133
    %s150 = sphi 0, %s134
  $region4: #{tpu_custom_call.1} parent=0 // loop_header_branch
    %13 = sbr.rel (%p11) target = $region8
  $region5: #{tpu_custom_call.1} parent=0 // loop_body
    %s15 = ssub.s32 %s10, 1
    %s16 = ssub.s32 %s10, 2
    %s23 = sadd.s32 1, %s18
    %p24 = scmp.ge.s32.totalorder %s23, 1
    %s25 = scalar_select %p24, 0, %s23
    %s26 = sadd.s32 1, %s17
    %s27 = scalar_select %p24, %s26, %s17
    %p28 = scmp.ge.s32.totalorder %s27, 2
    %s29 = scalar_select %p28, 0, %s27
    %s30 = ssub.s32 %s17, %s29
    %p31 = scmp.eq.s32.totalorder %s30, 0
    %s33 = sadd.s32 %s32, 1
    %s34 = scalar_select %p31, %s32, %s33
    %p37 = pneg %p31
    %p38 = scmp.eq.s32.totalorder %s10, 1
    %p39 = por %p37, %p38
    %p40 = scmp.ne.s32.totalorder %s32, %s35
    %p41 = scmp.eq.s32.totalorder %s10, 0
    %p42 = por %p40, %p41
    %p43 = scmp.ne.s32.totalorder %s32, %s35
    %p44 = scmp.eq.s32.totalorder %s15, 1
    %p45 = por %p43, %p44
    %p46 = scmp.ne.s32.totalorder %s35, %s36
    %p47 = scmp.eq.s32.totalorder %s15, 0
    %p48 = por %p46, %p47
    %p49 = scmp.ne.s32.totalorder %s35, %s36
    %p50 = scmp.eq.s32.totalorder %s16, 1
    %p51 = por %p49, %p50
    %p53 = scmp.ne.s32.totalorder %s36, %s52
    %p54 = scmp.eq.s32.totalorder %s16, 0
    %p55 = por %p53, %p54
    %s56 = ssub.s32 %s17, %s29
    %s57 = ssub.s32 %s18, %s25
    %s58 = sor.u32 %s56, %s57
    %p59 = scmp.eq.s32.totalorder %s58, 0
    %s61 = sadd.s32 %s60, 1
    %s62 = scalar_select %p59, %s60, %s61
    %p65 = pneg %p59
    %p66 = scmp.eq.s32.totalorder %s10, 1
    %p67 = por %p65, %p66
    %p68 = scmp.ne.s32.totalorder %s60, %s63
    %p69 = scmp.eq.s32.totalorder %s10, 0
    %p70 = por %p68, %p69
    %p71 = scmp.ne.s32.totalorder %s60, %s63
    %p72 = scmp.eq.s32.totalorder %s15, 1
    %p73 = por %p71, %p72
    %p74 = scmp.ne.s32.totalorder %s63, %s64
    %p75 = scmp.eq.s32.totalorder %s15, 0
    %p76 = por %p74, %p75
    %p77 = scmp.ne.s32.totalorder %s63, %s64
    %p78 = scmp.eq.s32.totalorder %s16, 1
    %p79 = por %p77, %p78
    %p81 = scmp.ne.s32.totalorder %s64, %s80
    %p82 = scmp.eq.s32.totalorder %s16, 0
    %p83 = por %p81, %p82
    %s85 = sadd.s32 %s84, 1
    %p88 = scmp.eq.s32.totalorder %s10, 1
    %p89 = scmp.ne.s32.totalorder %s84, %s86
    %p90 = scmp.eq.s32.totalorder %s10, 0
    %p91 = por %p89, %p90
    %p92 = scmp.ne.s32.totalorder %s84, %s86
    %p93 = scmp.eq.s32.totalorder %s15, 1
    %p94 = por %p92, %p93
    %p95 = scmp.ne.s32.totalorder %s86, %s87
    %p96 = scmp.eq.s32.totalorder %s15, 0
    %p97 = por %p95, %p96
    %p98 = scmp.ne.s32.totalorder %s86, %s87
    %p99 = scmp.eq.s32.totalorder %s16, 1
    %p100 = por %p98, %p99
    %p102 = scmp.ne.s32.totalorder %s87, %s101
    %p103 = scmp.eq.s32.totalorder %s16, 0
    %p104 = por %p102, %p103
    %s106 = sadd.s32 %s105, 1
    %p109 = scmp.eq.s32.totalorder %s10, 1
    %p110 = scmp.ne.s32.totalorder %s105, %s107
    %p111 = scmp.eq.s32.totalorder %s10, 0
    %p112 = por %p110, %p111
    %p113 = scmp.ne.s32.totalorder %s105, %s107
    %p114 = scmp.eq.s32.totalorder %s15, 1
    %p115 = por %p113, %p114
    %p116 = scmp.ne.s32.totalorder %s107, %s108
    %p117 = scmp.eq.s32.totalorder %s15, 0
    %p118 = por %p116, %p117
    %p119 = scmp.ne.s32.totalorder %s107, %s108
    %p120 = scmp.eq.s32.totalorder %s16, 1
    %p121 = por %p119, %p120
    %p123 = scmp.ne.s32.totalorder %s108, %s122
    %p124 = scmp.eq.s32.totalorder %s16, 0
    %p125 = por %p123, %p124
    %s126 = ssub.s32 %s17, %s29
    %s127 = ssub.s32 %s18, %s25
    %s128 = sor.u32 %s126, %s127
    %p129 = scmp.eq.s32.totalorder %s128, 0
    %s131 = sadd.s32 %s130, 1
    %s132 = scalar_select %p129, %s130, %s131
    %p135 = pneg %p129
    %p136 = scmp.eq.s32.totalorder %s10, 1
    %p137 = por %p135, %p136
    %p138 = scmp.ne.s32.totalorder %s130, %s133
    %p139 = scmp.eq.s32.totalorder %s10, 0
    %p140 = por %p138, %p139
    %p141 = scmp.ne.s32.totalorder %s130, %s133
    %p142 = scmp.eq.s32.totalorder %s15, 1
    %p143 = por %p141, %p142
    %p144 = scmp.ne.s32.totalorder %s133, %s134
    %p145 = scmp.eq.s32.totalorder %s15, 0
    %p146 = por %p144, %p145
    %p147 = scmp.ne.s32.totalorder %s133, %s134
    %p148 = scmp.eq.s32.totalorder %s16, 1
    %p149 = por %p147, %p148
    %p151 = scmp.ne.s32.totalorder %s134, %s150
    %p152 = scmp.eq.s32.totalorder %s16, 0
    %p153 = por %p151, %p152
    %p154 = scmp.le.s32.totalorder 1, %s10
    %p155 = scmp.lt.s32.totalorder %s10, 3
    %p156 = pnand %p154, %p155
    %p157 = pneg %p156
    // Predicated region
    $region9: #{tpu_custom_call.1} parent=5 // pred_check
      _
    $region10: #{tpu_custom_call.1} parent=5 // pred_check_branch
      %159 = sbr.rel (%p156) target = $region12
    $region11: #{tpu_custom_call.1} parent=5 // pred_region
      %s160 = ssub.s32 %s10, 1
      // Predicated region
      $region13: #{tpu_custom_call.1} parent=11 // pred_check
        %p161 = pneg %p97
      $region14: #{tpu_custom_call.1} parent=11 // pred_check_branch
        %163 = sbr.rel (%p161) target = $region16
      $region15: #{tpu_custom_call.1} parent=11 // pred_region
        _
      $region16: #{tpu_custom_call.1} parent=11 // pred_fallthru
        _
      // Predicated region
      $region17: #{tpu_custom_call.1} parent=11 // pred_check
        %p164 = pneg %p118
      $region18: #{tpu_custom_call.1} parent=11 // pred_check_branch
        %166 = sbr.rel (%p164) target = $region20
      $region19: #{tpu_custom_call.1} parent=11 // pred_region
        _
      $region20: #{tpu_custom_call.1} parent=11 // pred_fallthru
        _
    $region12: #{tpu_custom_call.1} parent=5 // pred_fallthru
      _
    %p167 = scmp.lt.s32.totalorder %s10, 2
    // Predicated region
    $region21: #{tpu_custom_call.1} parent=5 // pred_check
      %p168 = pneg %p167
    $region22: #{tpu_custom_call.1} parent=5 // pred_check_branch
      %170 = sbr.rel (%p168) target = $region24
    $region23: #{tpu_custom_call.1} parent=5 // pred_region
      // Predicated region
      $region25: #{tpu_custom_call.1} parent=23 // pred_check
        %p171 = pneg %p42
      $region26: #{tpu_custom_call.1} parent=23 // pred_check_branch
        %173 = sbr.rel (%p171) target = $region28
      $region27: #{tpu_custom_call.1} parent=23 // pred_region
        %p174 = scmp.lt.s32.totalorder %s17, 1
        %s175 = scalar_select %p174, %s17, 1
        %s176 = smul.addr %s175, 16
        %s177 = smul.addr %s176, 8
        %s178 = scalar_lea.vmem %s0, %s177
      $region28: #{tpu_custom_call.1} parent=23 // pred_fallthru
        _
      // Predicated region
      $region29: #{tpu_custom_call.1} parent=23 // pred_check
        %p179 = pneg %p70
      $region30: #{tpu_custom_call.1} parent=23 // pred_check_branch
        %181 = sbr.rel (%p179) target = $region32
      $region31: #{tpu_custom_call.1} parent=23 // pred_region
        %p182 = scmp.lt.s32.totalorder %s17, 1
        %s183 = scalar_select %p182, %s17, 1
        %p184 = scmp.lt.s32.totalorder %s18, 0
        %s185 = scalar_select %p184, %s18, 0
        %s186 = smul.addr %s183, 16
        %s187 = sadd.s32 %s185, %s186
        %s188 = smul.addr %s187, 8
        %s189 = scalar_lea.vmem %s1, %s188
      $region32: #{tpu_custom_call.1} parent=23 // pred_fallthru
        _
    $region24: #{tpu_custom_call.1} parent=5 // pred_fallthru
      _
    %p190 = scmp.le.s32.totalorder 1, %s10
    %p191 = scmp.lt.s32.totalorder %s10, 3
    %p192 = pnand %p190, %p191
    %p193 = pneg %p192
    // Predicated region
    $region33: #{tpu_custom_call.1} parent=5 // pred_check
      _
    $region34: #{tpu_custom_call.1} parent=5 // pred_check_branch
      %195 = sbr.rel (%p192) target = $region36
    $region35: #{tpu_custom_call.1} parent=5 // pred_region
      %s196 = ssub.s32 %s10, 1
      %p197 = scmp.lt.s32.totalorder %s19, 1
      %s198 = scalar_select %p197, %s19, 1
      %s199 = smul.addr %s198, 16
      %s200 = smul.addr %s199, 8
      %s201 = scalar_lea.vmem %s0, %s200
      %p202 = pneg %p48
      %p203 = pneg %p45
      %p204 = scmp.lt.s32.totalorder %s19, 1
      %s205 = scalar_select %p204, %s19, 1
      %p206 = scmp.lt.s32.totalorder %s20, 0
      %s207 = scalar_select %p206, %s20, 0
      %s208 = smul.addr %s205, 16
      %s209 = sadd.s32 %s207, %s208
      %s210 = smul.addr %s209, 8
      %s211 = scalar_lea.vmem %s1, %s210
      %p212 = pneg %p76
      %p213 = pneg %p73
      %p214 = pneg %p97
      %p215 = pneg %p94
      %p216 = pneg %p118
      %p217 = pneg %p115
      %p218 = pneg %p146
      %p219 = pneg %p143
      %p220 = scmp.lt.s32.totalorder %s19, 1
      %s221 = scalar_select %p220, %s19, 1
      %p222 = scmp.lt.s32.totalorder %s20, 0
      %s223 = scalar_select %p222, %s20, 0
      %s224 = smul.addr %s221, 16
      %s225 = sadd.s32 %s223, %s224
      %s226 = smul.addr %s225, 8
      %s227 = scalar_lea.vmem %s4, %s226
      %p228 = scmp.lt.s32.totalorder %s19, 1
      %s229 = scalar_select %p228, %s19, 1
      %s230 = smul.addr %s229, 16
      %s231 = smul.addr %s230, 8
      %s232 = scalar_lea.vmem %s0, %s231
      %p233 = scmp.lt.s32.totalorder %s19, 1
      %s234 = scalar_select %p233, %s19, 1
      %p235 = scmp.lt.s32.totalorder %s20, 0
      %s236 = scalar_select %p235, %s20, 0
      %s237 = smul.addr %s234, 16
      %s238 = sadd.s32 %s236, %s237
      %s239 = smul.addr %s238, 8
      %s240 = scalar_lea.vmem %s1, %s239
      %p241 = scmp.lt.s32.totalorder %s19, 1
      %s242 = scalar_select %p241, %s19, 1
      %p243 = scmp.lt.s32.totalorder %s20, 0
      %s244 = scalar_select %p243, %s20, 0
      %s245 = smul.addr %s242, 16
      %s246 = sadd.s32 %s244, %s245
      %s247 = smul.addr %s246, 8
      %s248 = scalar_lea.vmem %s4, %s247
      %p249 = scmp.eq.s32.totalorder %s20, 0
      // Predicated region
      $region37: #{tpu_custom_call.1} parent=35 // pred_check
        %p250 = pneg %p249
      $region38: #{tpu_custom_call.1} parent=35 // pred_check_branch
        %252 = sbr.rel (%p250) target = $region40
      $region39: #{tpu_custom_call.1} parent=35 // pred_region
        %v253 = vld [vmem:[%s2] sm:$0xff]
        %v254 = vld [vmem:[%s2 + $0x8] sm:$0xff]
        %v255 = vld [vmem:[%s2 + $0x10] sm:$0xff]
        %v256 = vld [vmem:[%s2 + $0x18] sm:$0xff]
        %v257 = vld [vmem:[%s2 + $0x20] sm:$0xff]
        %v258 = vld [vmem:[%s2 + $0x28] sm:$0xff]
        %v259 = vld [vmem:[%s2 + $0x30] sm:$0xff]
        %v260 = vld [vmem:[%s2 + $0x38] sm:$0xff]
        %v261 = vld [vmem:[%s2 + $0x40] sm:$0xff]
        %v262 = vld [vmem:[%s2 + $0x48] sm:$0xff]
        %v263 = vld [vmem:[%s2 + $0x50] sm:$0xff]
        %v264 = vld [vmem:[%s2 + $0x58] sm:$0xff]
        %v265 = vld [vmem:[%s2 + $0x60] sm:$0xff]
        %v266 = vld [vmem:[%s2 + $0x68] sm:$0xff]
        %v267 = vld [vmem:[%s2 + $0x70] sm:$0xff]
        %v268 = vld [vmem:[%s2 + $0x78] sm:$0xff]
        %v269 = vld [vmem:[%s2 + $0x80] sm:$0xff]
        %v270 = vld [vmem:[%s2 + $0x88] sm:$0xff]
        %v271 = vld [vmem:[%s2 + $0x90] sm:$0xff]
        %v272 = vld [vmem:[%s2 + $0x98] sm:$0xff]
        %v273 = vld [vmem:[%s2 + $0xa0] sm:$0xff]
        %v274 = vld [vmem:[%s2 + $0xa8] sm:$0xff]
        %v275 = vld [vmem:[%s2 + $0xb0] sm:$0xff]
        %v276 = vld [vmem:[%s2 + $0xb8] sm:$0xff]
        %v277 = vld [vmem:[%s2 + $0xc0] sm:$0xff]
        %v278 = vld [vmem:[%s2 + $0xc8] sm:$0xff]
        %v279 = vld [vmem:[%s2 + $0xd0] sm:$0xff]
        %v280 = vld [vmem:[%s2 + $0xd8] sm:$0xff]
        %v281 = vld [vmem:[%s2 + $0xe0] sm:$0xff]
        %v282 = vld [vmem:[%s2 + $0xe8] sm:$0xff]
        %v283 = vld [vmem:[%s2 + $0xf0] sm:$0xff]
        %v284 = vld [vmem:[%s2 + $0xf8] sm:$0xff]
        %v285 = vld [vmem:[%s232] sm:$0xff]
        %v286 = vld [vmem:[%s232 + $0x8] sm:$0xff]
        %v287 = vld [vmem:[%s232 + $0x10] sm:$0xff]
        %v288 = vld [vmem:[%s232 + $0x18] sm:$0xff]
        %v289 = vld [vmem:[%s232 + $0x20] sm:$0xff]
        %v290 = vld [vmem:[%s232 + $0x28] sm:$0xff]
        %v291 = vld [vmem:[%s232 + $0x30] sm:$0xff]
        %v292 = vld [vmem:[%s232 + $0x38] sm:$0xff]
        %v293 = vld [vmem:[%s232 + $0x40] sm:$0xff]
        %v294 = vld [vmem:[%s232 + $0x48] sm:$0xff]
        %v295 = vld [vmem:[%s232 + $0x50] sm:$0xff]
        %v296 = vld [vmem:[%s232 + $0x58] sm:$0xff]
        %v297 = vld [vmem:[%s232 + $0x60] sm:$0xff]
        %v298 = vld [vmem:[%s232 + $0x68] sm:$0xff]
        %v299 = vld [vmem:[%s232 + $0x70] sm:$0xff]
        %v300 = vld [vmem:[%s232 + $0x78] sm:$0xff]
        %301 = vmatprep.subr.mxu0 0.0
        %302 = vmatpush1.msra.mxu0 %v285
        %303 = vmatprep.subr.mxu0 0.0
        %304 = vmatpush1.msra.mxu0 %v286
        %305 = vmatprep.subr.mxu0 0.0
        %306 = vmatpush1.msra.mxu0 %v287
        %307 = vmatprep.subr.mxu0 0.0
        %308 = vmatpush1.msra.mxu0 %v288
        %309 = vmatprep.subr.mxu0 0.0
        %310 = vmatpush1.msra.mxu0 %v289
        %311 = vmatprep.subr.mxu0 0.0
        %312 = vmatpush1.msra.mxu0 %v290
        %313 = vmatprep.subr.mxu0 0.0
        %314 = vmatpush1.msra.mxu0 %v291
        %315 = vmatprep.subr.mxu0 0.0
        %316 = vmatpush1.msra.mxu0 %v292
        %317 = vmatprep.subr.mxu0 0.0
        %318 = vmatpush1.msra.mxu0 %v293
        %319 = vmatprep.subr.mxu0 0.0
        %320 = vmatpush1.msra.mxu0 %v294
        %321 = vmatprep.subr.mxu0 0.0
        %322 = vmatpush1.msra.mxu0 %v295
        %323 = vmatprep.subr.mxu0 0.0
        %324 = vmatpush1.msra.mxu0 %v296
        %325 = vmatprep.subr.mxu0 0.0
        %326 = vmatpush1.msra.mxu0 %v297
        %327 = vmatprep.subr.mxu0 0.0
        %328 = vmatpush1.msra.mxu0 %v298
        %329 = vmatprep.subr.mxu0 0.0
        %330 = vmatpush1.msra.mxu0 %v299
        %331 = vmatprep.subr.mxu0 0.0
        %332 = vmatpush1.msra.mxu0 %v300
        %333 = vmatprep.subr.mxu0 0.0
        %334 = vmatpush1.msra.mxu0 0.0
        %335 = vmatprep.subr.mxu0 0.0
        %336 = vmatpush1.msra.mxu0 0.0
        %337 = vmatprep.subr.mxu0 0.0
        %338 = vmatpush1.msra.mxu0 0.0
        %339 = vmatprep.subr.mxu0 0.0
        %340 = vmatpush1.msra.mxu0 0.0
        %341 = vmatprep.subr.mxu0 0.0
        %342 = vmatpush1.msra.mxu0 0.0
        %343 = vmatprep.subr.mxu0 0.0
        %344 = vmatpush1.msra.mxu0 0.0
        %345 = vmatprep.subr.mxu0 0.0
        %346 = vmatpush1.msra.mxu0 0.0
        %347 = vmatprep.subr.mxu0 0.0
        %348 = vmatpush1.msra.mxu0 0.0
        %349 = vmatprep.subr.mxu0 0.0
        %350 = vmatpush1.msra.mxu0 0.0
        %351 = vmatprep.subr.mxu0 0.0
        %352 = vmatpush1.msra.mxu0 0.0
        %353 = vmatprep.subr.mxu0 0.0
        %354 = vmatpush1.msra.mxu0 0.0
        %355 = vmatprep.subr.mxu0 0.0
        %356 = vmatpush1.msra.mxu0 0.0
        %357 = vmatprep.subr.mxu0 0.0
        %358 = vmatpush1.msra.mxu0 0.0
        %359 = vmatprep.subr.mxu0 0.0
        %360 = vmatpush1.msra.mxu0 0.0
        %361 = vmatprep.subr.mxu0 0.0
        %362 = vmatpush1.msra.mxu0 0.0
        %363 = vmatprep.subr.mxu0 0.0
        %364 = vmatpush1.msra.mxu0 0.0
        %365 = vmatprep.mubr.f32.mxu0 0.0
        %366 = vmatmul.mubr.f32.gmra.mrb[0].mxu0 %v253
        %v367 = vpop.f32.mrb[0].mxu0
        %v368 = vadd.f32 0.0, %v367
        %v369 = vpop.f32.mrb[0].mxu0
        %370 = vmatprep.mubr.f32.mxu0 0.0
        %371 = vmatmul.mubr.f32.gmra.mrb[0].mxu0 %v254
        %v372 = vpop.f32.mrb[0].mxu0
        %v373 = vadd.f32 0.0, %v372
        %v374 = vpop.f32.mrb[0].mxu0
        %375 = vmatprep.mubr.f32.mxu0 0.0
        %376 = vmatmul.mubr.f32.gmra.mrb[0].mxu0 %v255
        %v377 = vpop.f32.mrb[0].mxu0
        %v378 = vadd.f32 0.0, %v377
        %v379 = vpop.f32.mrb[0].mxu0
        %380 = vmatprep.mubr.f32.mxu0 0.0
        %381 = vmatmul.mubr.f32.gmra.mrb[0].mxu0 %v256
        %v382 = vpop.f32.mrb[0].mxu0
        %v383 = vadd.f32 0.0, %v382
        %v384 = vpop.f32.mrb[0].mxu0
        %385 = vmatprep.mubr.f32.mxu0 0.0
        %386 = vmatmul.mubr.f32.gmra.mrb[0].mxu0 %v257
        %v387 = vpop.f32.mrb[0].mxu0
        %v388 = vadd.f32 0.0, %v387
        %v389 = vpop.f32.mrb[0].mxu0
        %390 = vmatprep.mubr.f32.mxu0 0.0
        %391 = vmatmul.mubr.f32.gmra.mrb[0].mxu0 %v258
        %v392 = vpop.f32.mrb[0].mxu0
        %v393 = vadd.f32 0.0, %v392
        %v394 = vpop.f32.mrb[0].mxu0
        %395 = vmatprep.mubr.f32.mxu0 0.0
        %396 = vmatmul.mubr.f32.gmra.mrb[0].mxu0 %v259
        %v397 = vpop.f32.mrb[0].mxu0
        %v398 = vadd.f32 0.0, %v397
        %v399 = vpop.f32.mrb[0].mxu0
        %400 = vmatprep.mubr.f32.mxu0 0.0
        %401 = vmatmul.mubr.f32.gmra.mrb[0].mxu0 %v260
        %v402 = vpop.f32.mrb[0].mxu0
        %v403 = vadd.f32 0.0, %v402
        %v404 = vpop.f32.mrb[0].mxu0
        %405 = vmatprep.mubr.f32.mxu0 0.0
        %406 = vmatmul.mubr.f32.gmra.mrb[0].mxu0 %v261
        %v407 = vpop.f32.mrb[0].mxu0
        %v408 = vadd.f32 0.0, %v407
        %v409 = vpop.f32.mrb[0].mxu0
        %410 = vmatprep.mubr.f32.mxu0 0.0
        %411 = vmatmul.mubr.f32.gmra.mrb[0].mxu0 %v262
        %v412 = vpop.f32.mrb[0].mxu0
        %v413 = vadd.f32 0.0, %v412
        %v414 = vpop.f32.mrb[0].mxu0
        %415 = vmatprep.mubr.f32.mxu0 0.0
        %416 = vmatmul.mubr.f32.gmra.mrb[0].mxu0 %v263
        %v417 = vpop.f32.mrb[0].mxu0
        %v418 = vadd.f32 0.0, %v417
        %v419 = vpop.f32.mrb[0].mxu0
        %420 = vmatprep.mubr.f32.mxu0 0.0
        %421 = vmatmul.mubr.f32.gmra.mrb[0].mxu0 %v264
        %v422 = vpop.f32.mrb[0].mxu0
        %v423 = vadd.f32 0.0, %v422
        %v424 = vpop.f32.mrb[0].mxu0
        %425 = vmatprep.mubr.f32.mxu0 0.0
        %426 = vmatmul.mubr.f32.gmra.mrb[0].mxu0 %v265
        %v427 = vpop.f32.mrb[0].mxu0
        %v428 = vadd.f32 0.0, %v427
        %v429 = vpop.f32.mrb[0].mxu0
        %430 = vmatprep.mubr.f32.mxu0 0.0
        %431 = vmatmul.mubr.f32.gmra.mrb[0].mxu0 %v266
        %v432 = vpop.f32.mrb[0].mxu0
        %v433 = vadd.f32 0.0, %v432
        %v434 = vpop.f32.mrb[0].mxu0
        %435 = vmatprep.mubr.f32.mxu0 0.0
        %436 = vmatmul.mubr.f32.gmra.mrb[0].mxu0 %v267
        %v437 = vpop.f32.mrb[0].mxu0
        %v438 = vadd.f32 0.0, %v437
        %v439 = vpop.f32.mrb[0].mxu0
        %440 = vmatprep.mubr.f32.mxu0 0.0
        %441 = vmatmul.mubr.f32.gmra.mrb[0].mxu0 %v268
        %v442 = vpop.f32.mrb[0].mxu0
        %v443 = vadd.f32 0.0, %v442
        %v444 = vpop.f32.mrb[0].mxu0
        %445 = vmatprep.mubr.f32.mxu0 0.0
        %446 = vmatmul.mubr.f32.gmra.mrb[0].mxu0 %v269
        %v447 = vpop.f32.mrb[0].mxu0
        %v448 = vadd.f32 0.0, %v447
        %v449 = vpop.f32.mrb[0].mxu0
        %450 = vmatprep.mubr.f32.mxu0 0.0
        %451 = vmatmul.mubr.f32.gmra.mrb[0].mxu0 %v270
        %v452 = vpop.f32.mrb[0].mxu0
        %v453 = vadd.f32 0.0, %v452
        %v454 = vpop.f32.mrb[0].mxu0
        %455 = vmatprep.mubr.f32.mxu0 0.0
        %456 = vmatmul.mubr.f32.gmra.mrb[0].mxu0 %v271
        %v457 = vpop.f32.mrb[0].mxu0
        %v458 = vadd.f32 0.0, %v457
        %v459 = vpop.f32.mrb[0].mxu0
        %460 = vmatprep.mubr.f32.mxu0 0.0
        %461 = vmatmul.mubr.f32.gmra.mrb[0].mxu0 %v272
        %v462 = vpop.f32.mrb[0].mxu0
        %v463 = vadd.f32 0.0, %v462
        %v464 = vpop.f32.mrb[0].mxu0
        %465 = vmatprep.mubr.f32.mxu0 0.0
        %466 = vmatmul.mubr.f32.gmra.mrb[0].mxu0 %v273
        %v467 = vpop.f32.mrb[0].mxu0
        %v468 = vadd.f32 0.0, %v467
        %v469 = vpop.f32.mrb[0].mxu0
        %470 = vmatprep.mubr.f32.mxu0 0.0
        %471 = vmatmul.mubr.f32.gmra.mrb[0].mxu0 %v274
        %v472 = vpop.f32.mrb[0].mxu0
        %v473 = vadd.f32 0.0, %v472
        %v474 = vpop.f32.mrb[0].mxu0
        %475 = vmatprep.mubr.f32.mxu0 0.0
        %476 = vmatmul.mubr.f32.gmra.mrb[0].mxu0 %v275
        %v477 = vpop.f32.mrb[0].mxu0
        %v478 = vadd.f32 0.0, %v477
        %v479 = vpop.f32.mrb[0].mxu0
        %480 = vmatprep.mubr.f32.mxu0 0.0
        %481 = vmatmul.mubr.f32.gmra.mrb[0].mxu0 %v276
        %v482 = vpop.f32.mrb[0].mxu0
        %v483 = vadd.f32 0.0, %v482
        %v484 = vpop.f32.mrb[0].mxu0
        %485 = vmatprep.mubr.f32.mxu0 0.0
        %486 = vmatmul.mubr.f32.gmra.mrb[0].mxu0 %v277
        %v487 = vpop.f32.mrb[0].mxu0
        %v488 = vadd.f32 0.0, %v487
        %v489 = vpop.f32.mrb[0].mxu0
        %490 = vmatprep.mubr.f32.mxu0 0.0
        %491 = vmatmul.mubr.f32.gmra.mrb[0].mxu0 %v278
        %v492 = vpop.f32.mrb[0].mxu0
        %v493 = vadd.f32 0.0, %v492
        %v494 = vpop.f32.mrb[0].mxu0
        %495 = vmatprep.mubr.f32.mxu0 0.0
        %496 = vmatmul.mubr.f32.gmra.mrb[0].mxu0 %v279
        %v497 = vpop.f32.mrb[0].mxu0
        %v498 = vadd.f32 0.0, %v497
        %v499 = vpop.f32.mrb[0].mxu0
        %500 = vmatprep.mubr.f32.mxu0 0.0
        %501 = vmatmul.mubr.f32.gmra.mrb[0].mxu0 %v280
        %v502 = vpop.f32.mrb[0].mxu0
        %v503 = vadd.f32 0.0, %v502
        %v504 = vpop.f32.mrb[0].mxu0
        %505 = vmatprep.mubr.f32.mxu0 0.0
        %506 = vmatmul.mubr.f32.gmra.mrb[0].mxu0 %v281
        %v507 = vpop.f32.mrb[0].mxu0
        %v508 = vadd.f32 0.0, %v507
        %v509 = vpop.f32.mrb[0].mxu0
        %510 = vmatprep.mubr.f32.mxu0 0.0
        %511 = vmatmul.mubr.f32.gmra.mrb[0].mxu0 %v282
        %v512 = vpop.f32.mrb[0].mxu0
        %v513 = vadd.f32 0.0, %v512
        %v514 = vpop.f32.mrb[0].mxu0
        %515 = vmatprep.mubr.f32.mxu0 0.0
        %516 = vmatmul.mubr.f32.gmra.mrb[0].mxu0 %v283
        %v517 = vpop.f32.mrb[0].mxu0
        %v518 = vadd.f32 0.0, %v517
        %v519 = vpop.f32.mrb[0].mxu0
        %520 = vmatprep.mubr.f32.mxu0 0.0
        %521 = vmatmul.mubr.f32.gmra.mrb[0].mxu0 %v284
        %v522 = vpop.f32.mrb[0].mxu0
        %v523 = vadd.f32 0.0, %v522
        %v524 = vpop.f32.mrb[0].mxu0
        %525 = vdwg.mxu0
        %vm526 = vcmask 64512
        %527 = vst.msk [vmem:[#allocation2] sm:$0xff] %vm526, %v368
        %528 = vst.msk [vmem:[#allocation2 + $0x8] sm:$0xff] %vm526, %v373
        %529 = vst.msk [vmem:[#allocation2 + $0x10] sm:$0xff] %vm526, %v378
        %530 = vst.msk [vmem:[#allocation2 + $0x18] sm:$0xff] %vm526, %v383
        %531 = vst.msk [vmem:[#allocation2 + $0x20] sm:$0xff] %vm526, %v388
        %532 = vst.msk [vmem:[#allocation2 + $0x28] sm:$0xff] %vm526, %v393
        %533 = vst.msk [vmem:[#allocation2 + $0x30] sm:$0xff] %vm526, %v398
        %534 = vst.msk [vmem:[#allocation2 + $0x38] sm:$0xff] %vm526, %v403
        %535 = vst.msk [vmem:[#allocation2 + $0x40] sm:$0xff] %vm526, %v408
        %536 = vst.msk [vmem:[#allocation2 + $0x48] sm:$0xff] %vm526, %v413
        %537 = vst.msk [vmem:[#allocation2 + $0x50] sm:$0xff] %vm526, %v418
        %538 = vst.msk [vmem:[#allocation2 + $0x58] sm:$0xff] %vm526, %v423
        %539 = vst.msk [vmem:[#allocation2 + $0x60] sm:$0xff] %vm526, %v428
        %540 = vst.msk [vmem:[#allocation2 + $0x68] sm:$0xff] %vm526, %v433
        %541 = vst.msk [vmem:[#allocation2 + $0x70] sm:$0xff] %vm526, %v438
        %542 = vst.msk [vmem:[#allocation2 + $0x78] sm:$0xff] %vm526, %v443
        %543 = vst.msk [vmem:[#allocation2 + $0x80] sm:$0xff] %vm526, %v448
        %544 = vst.msk [vmem:[#allocation2 + $0x88] sm:$0xff] %vm526, %v453
        %545 = vst.msk [vmem:[#allocation2 + $0x90] sm:$0xff] %vm526, %v458
        %546 = vst.msk [vmem:[#allocation2 + $0x98] sm:$0xff] %vm526, %v463
        %547 = vst.msk [vmem:[#allocation2 + $0xa0] sm:$0xff] %vm526, %v468
        %548 = vst.msk [vmem:[#allocation2 + $0xa8] sm:$0xff] %vm526, %v473
        %549 = vst.msk [vmem:[#allocation2 + $0xb0] sm:$0xff] %vm526, %v478
        %550 = vst.msk [vmem:[#allocation2 + $0xb8] sm:$0xff] %vm526, %v483
        %551 = vst.msk [vmem:[#allocation2 + $0xc0] sm:$0xff] %vm526, %v488
        %552 = vst.msk [vmem:[#allocation2 + $0xc8] sm:$0xff] %vm526, %v493
        %553 = vst.msk [vmem:[#allocation2 + $0xd0] sm:$0xff] %vm526, %v498
        %554 = vst.msk [vmem:[#allocation2 + $0xd8] sm:$0xff] %vm526, %v503
        %555 = vst.msk [vmem:[#allocation2 + $0xe0] sm:$0xff] %vm526, %v508
        %556 = vst.msk [vmem:[#allocation2 + $0xe8] sm:$0xff] %vm526, %v513
        %557 = vst.msk [vmem:[#allocation2 + $0xf0] sm:$0xff] %vm526, %v518
        %558 = vst.msk [vmem:[#allocation2 + $0xf8] sm:$0xff] %vm526, %v523
      $region40: #{tpu_custom_call.1} parent=35 // pred_fallthru
        _
      %v559 = vld [vmem:[%s240] sm:$0xff]
      %v560 = vld [vmem:[%s240 + $0x8] sm:$0xff]
      %v561 = vld [vmem:[%s240 + $0x10] sm:$0xff]
      %v562 = vld [vmem:[%s240 + $0x18] sm:$0xff]
      %v563 = vld [vmem:[%s240 + $0x20] sm:$0xff]
      %v564 = vld [vmem:[%s240 + $0x28] sm:$0xff]
      %v565 = vld [vmem:[%s240 + $0x30] sm:$0xff]
      %v566 = vld [vmem:[%s240 + $0x38] sm:$0xff]
      %v567 = vld [vmem:[%s240 + $0x40] sm:$0xff]
      %v568 = vld [vmem:[%s240 + $0x48] sm:$0xff]
      %v569 = vld [vmem:[%s240 + $0x50] sm:$0xff]
      %v570 = vld [vmem:[%s240 + $0x58] sm:$0xff]
      %v571 = vld [vmem:[%s240 + $0x60] sm:$0xff]
      %v572 = vld [vmem:[%s240 + $0x68] sm:$0xff]
      %v573 = vld [vmem:[%s240 + $0x70] sm:$0xff]
      %v574 = vld [vmem:[%s240 + $0x78] sm:$0xff]
      %v575 = vld [vmem:[#allocation2] sm:$0xff]
      %v576 = vld [vmem:[#allocation2 + $0x8] sm:$0xff]
      %v577 = vld [vmem:[#allocation2 + $0x10] sm:$0xff]
      %v578 = vld [vmem:[#allocation2 + $0x18] sm:$0xff]
      %v579 = vld [vmem:[#allocation2 + $0x20] sm:$0xff]
      %v580 = vld [vmem:[#allocation2 + $0x28] sm:$0xff]
      %v581 = vld [vmem:[#allocation2 + $0x30] sm:$0xff]
      %v582 = vld [vmem:[#allocation2 + $0x38] sm:$0xff]
      %v583 = vld [vmem:[#allocation2 + $0x40] sm:$0xff]
      %v584 = vld [vmem:[#allocation2 + $0x48] sm:$0xff]
      %v585 = vld [vmem:[#allocation2 + $0x50] sm:$0xff]
      %v586 = vld [vmem:[#allocation2 + $0x58] sm:$0xff]
      %v587 = vld [vmem:[#allocation2 + $0x60] sm:$0xff]
      %v588 = vld [vmem:[#allocation2 + $0x68] sm:$0xff]
      %v589 = vld [vmem:[#allocation2 + $0x70] sm:$0xff]
      %v590 = vld [vmem:[#allocation2 + $0x78] sm:$0xff]
      %v591 = vld [vmem:[#allocation2 + $0x80] sm:$0xff]
      %v592 = vld [vmem:[#allocation2 + $0x88] sm:$0xff]
      %v593 = vld [vmem:[#allocation2 + $0x90] sm:$0xff]
      %v594 = vld [vmem:[#allocation2 + $0x98] sm:$0xff]
      %v595 = vld [vmem:[#allocation2 + $0xa0] sm:$0xff]
      %v596 = vld [vmem:[#allocation2 + $0xa8] sm:$0xff]
      %v597 = vld [vmem:[#allocation2 + $0xb0] sm:$0xff]
      %v598 = vld [vmem:[#allocation2 + $0xb8] sm:$0xff]
      %v599 = vld [vmem:[#allocation2 + $0xc0] sm:$0xff]
      %v600 = vld [vmem:[#allocation2 + $0xc8] sm:$0xff]
      %v601 = vld [vmem:[#allocation2 + $0xd0] sm:$0xff]
      %v602 = vld [vmem:[#allocation2 + $0xd8] sm:$0xff]
      %v603 = vld [vmem:[#allocation2 + $0xe0] sm:$0xff]
      %v604 = vld [vmem:[#allocation2 + $0xe8] sm:$0xff]
      %v605 = vld [vmem:[#allocation2 + $0xf0] sm:$0xff]
      %v606 = vld [vmem:[#allocation2 + $0xf8] sm:$0xff]
      %607 = vxpose.xlu0.b32.start [1/16] %v559, 128
      %608 = vxpose.xlu0.b32.cont [2/16] %v560, 128
      %609 = vxpose.xlu0.b32.cont [3/16] %v561, 128
      %610 = vxpose.xlu0.b32.cont [4/16] %v562, 128
      %611 = vxpose.xlu0.b32.cont [5/16] %v563, 128
      %612 = vxpose.xlu0.b32.cont [6/16] %v564, 128
      %613 = vxpose.xlu0.b32.cont [7/16] %v565, 128
      %614 = vxpose.xlu0.b32.cont [8/16] %v566, 128
      %615 = vxpose.xlu0.b32.cont [9/16] %v567, 128
      %616 = vxpose.xlu0.b32.cont [10/16] %v568, 128
      %617 = vxpose.xlu0.b32.cont [11/16] %v569, 128
      %618 = vxpose.xlu0.b32.cont [12/16] %v570, 128
      %619 = vxpose.xlu0.b32.cont [13/16] %v571, 128
      %620 = vxpose.xlu0.b32.cont [14/16] %v572, 128
      %621 = vxpose.xlu0.b32.cont [15/16] %v573, 128
      %622 = vxpose.xlu0.b32.end [16/16] %v574, 128
      %v623 = vpop.trf.xlu0
      %v624 = vpop.trf.xlu0
      %v625 = vpop.trf.xlu0
      %v626 = vpop.trf.xlu0
      %v627 = vpop.trf.xlu0
      %v628 = vpop.trf.xlu0
      %v629 = vpop.trf.xlu0
      %v630 = vpop.trf.xlu0
      %v631 = vpop.trf.xlu0
      %v632 = vpop.trf.xlu0
      %v633 = vpop.trf.xlu0
      %v634 = vpop.trf.xlu0
      %v635 = vpop.trf.xlu0
      %v636 = vpop.trf.xlu0
      %v637 = vpop.trf.xlu0
      %v638 = vpop.trf.xlu0
      %639 = vmatprep.subr.mxu0 0.0
      %640 = vmatpush1.msra.mxu0 %v575
      %641 = vmatprep.subr.mxu0 0.0
      %642 = vmatpush1.msra.mxu0 %v576
      %643 = vmatprep.subr.mxu0 0.0
      %644 = vmatpush1.msra.mxu0 %v577
      %645 = vmatprep.subr.mxu0 0.0
      %646 = vmatpush1.msra.mxu0 %v578
      %647 = vmatprep.subr.mxu0 0.0
      %648 = vmatpush1.msra.mxu0 %v579
      %649 = vmatprep.subr.mxu0 0.0
      %650 = vmatpush1.msra.mxu0 %v580
      %651 = vmatprep.subr.mxu0 0.0
      %652 = vmatpush1.msra.mxu0 %v581
      %653 = vmatprep.subr.mxu0 0.0
      %654 = vmatpush1.msra.mxu0 %v582
      %655 = vmatprep.subr.mxu0 0.0
      %656 = vmatpush1.msra.mxu0 %v583
      %657 = vmatprep.subr.mxu0 0.0
      %658 = vmatpush1.msra.mxu0 %v584
      %659 = vmatprep.subr.mxu0 0.0
      %660 = vmatpush1.msra.mxu0 %v585
      %661 = vmatprep.subr.mxu0 0.0
      %662 = vmatpush1.msra.mxu0 %v586
      %663 = vmatprep.subr.mxu0 0.0
      %664 = vmatpush1.msra.mxu0 %v587
      %665 = vmatprep.subr.mxu0 0.0
      %666 = vmatpush1.msra.mxu0 %v588
      %667 = vmatprep.subr.mxu0 0.0
      %668 = vmatpush1.msra.mxu0 %v589
      %669 = vmatprep.subr.mxu0 0.0
      %670 = vmatpush1.msra.mxu0 %v590
      %671 = vmatprep.subr.mxu0 0.0
      %672 = vmatpush1.msra.mxu0 0.0
      %673 = vmatprep.subr.mxu0 0.0
      %674 = vmatpush1.msra.mxu0 0.0
      %675 = vmatprep.subr.mxu0 0.0
      %676 = vmatpush1.msra.mxu0 0.0
      %677 = vmatprep.subr.mxu0 0.0
      %678 = vmatpush1.msra.mxu0 0.0
      %679 = vmatprep.subr.mxu0 0.0
      %680 = vmatpush1.msra.mxu0 0.0
      %681 = vmatprep.subr.mxu0 0.0
      %682 = vmatpush1.msra.mxu0 0.0
      %683 = vmatprep.subr.mxu0 0.0
      %684 = vmatpush1.msra.mxu0 0.0
      %685 = vmatprep.subr.mxu0 0.0
      %686 = vmatpush1.msra.mxu0 0.0
      %687 = vmatprep.subr.mxu0 0.0
      %688 = vmatpush1.msra.mxu0 0.0
      %689 = vmatprep.subr.mxu0 0.0
      %690 = vmatpush1.msra.mxu0 0.0
      %691 = vmatprep.subr.mxu0 0.0
      %692 = vmatpush1.msra.mxu0 0.0
      %693 = vmatprep.subr.mxu0 0.0
      %694 = vmatpush1.msra.mxu0 0.0
      %695 = vmatprep.subr.mxu0 0.0
      %696 = vmatpush1.msra.mxu0 0.0
      %697 = vmatprep.subr.mxu0 0.0
      %698 = vmatpush1.msra.mxu0 0.0
      %699 = vmatprep.subr.mxu0 0.0
      %700 = vmatpush1.msra.mxu0 0.0
      %701 = vmatprep.subr.mxu0 0.0
      %702 = vmatpush1.msra.mxu0 0.0
      %703 = vmatprep.mubr.f32.mxu0 0.0
      %704 = vmatmul.mubr.f32.gmra.mrb[0].mxu0 %v623
      %v705 = vpop.f32.mrb[0].mxu0
      %v706 = vadd.f32 0.0, %v705
      %v707 = vpop.f32.mrb[0].mxu0
      %708 = vmatprep.mubr.f32.mxu0 0.0
      %709 = vmatmul.mubr.f32.gmra.mrb[0].mxu0 %v624
      %v710 = vpop.f32.mrb[0].mxu0
      %v711 = vadd.f32 0.0, %v710
      %v712 = vpop.f32.mrb[0].mxu0
      %713 = vdwg.mxu0
      %vm714 = vcmask 64512
      %v715 = vsel %vm714, %v706, -inf
      %716 = vmax.xlane.f32.xlu0 %v715
      %v717 = vpop.xlane.xlu0 %716
      %v718 = vsel %vm714, %v711, -inf
      %719 = vmax.xlane.f32.xlu0 %v718
      %v720 = vpop.xlane.xlu0 %719
      %v721 = vsub.f32 %v706, %v717
      %v722 = vsub.f32 %v711, %v720
      %v723 = vmul.f32 %v721, 1.442695
      %v724 = vpow.pop %v723
      %v725 = vmul.f32 %v722, 1.442695
      %v726 = vpow.pop %v725
      %v727 = vsel %vm714, %v724, 0.0
      %728 = vadd.xlane.f32.xlu0 %v727
      %v729 = vpop.xlane.xlu0 %728
      %v730 = vsel %vm714, %v726, 0.0
      %731 = vadd.xlane.f32.xlu0 %v730
      %v732 = vpop.xlane.xlu0 %731
      %v733 = vrcp.pop %v729
      %v734 = vrcp.pop %v732
      %v735 = vmul.f32 %v724, %v733
      %v736 = vmul.f32 %v726, %v734
      %v738 = vsel %vm714, %v591, 0
      %v741 = vsel %vm714, %v592, 0
      %v744 = vsel %vm714, %v593, 0
      %v747 = vsel %vm714, %v594, 0
      %v750 = vsel %vm714, %v595, 0
      %v753 = vsel %vm714, %v596, 0
      %v756 = vsel %vm714, %v597, 0
      %v759 = vsel %vm714, %v598, 0
      %v762 = vsel %vm714, %v599, 0
      %v765 = vsel %vm714, %v600, 0
      %v768 = vsel %vm714, %v601, 0
      %v771 = vsel %vm714, %v602, 0
      %v774 = vsel %vm714, %v603, 0
      %v777 = vsel %vm714, %v604, 0
      %v780 = vsel %vm714, %v605, 0
      %v783 = vsel %vm714, %v606, 0
      %v786 = vsel %vm714, %v735, 0
      %v789 = vsel %vm714, %v736, 0
      %791 = vmatprep.subr.mxu0 0.0
      %792 = vmatpush1.xpose.msra.mxu0 %v786
      %793 = vmatprep.subr.mxu0 0.0
      %794 = vmatpush1.xpose.msra.mxu0 %v789
      %795 = vmatprep.subr.mxu0 0.0
      %796 = vmatpush1.xpose.msra.mxu0 0.0
      %797 = vmatprep.subr.mxu0 0.0
      %798 = vmatpush1.xpose.msra.mxu0 0.0
      %799 = vmatprep.subr.mxu0 0.0
      %800 = vmatpush1.xpose.msra.mxu0 0.0
      %801 = vmatprep.subr.mxu0 0.0
      %802 = vmatpush1.xpose.msra.mxu0 0.0
      %803 = vmatprep.subr.mxu0 0.0
      %804 = vmatpush1.xpose.msra.mxu0 0.0
      %805 = vmatprep.subr.mxu0 0.0
      %806 = vmatpush1.xpose.msra.mxu0 0.0
      %807 = vmatprep.subr.mxu0 0.0
      %808 = vmatpush1.xpose.msra.mxu0 0.0
      %809 = vmatprep.subr.mxu0 0.0
      %810 = vmatpush1.xpose.msra.mxu0 0.0
      %811 = vmatprep.subr.mxu0 0.0
      %812 = vmatpush1.xpose.msra.mxu0 0.0
      %813 = vmatprep.subr.mxu0 0.0
      %814 = vmatpush1.xpose.msra.mxu0 0.0
      %815 = vmatprep.subr.mxu0 0.0
      %816 = vmatpush1.xpose.msra.mxu0 0.0
      %817 = vmatprep.subr.mxu0 0.0
      %818 = vmatpush1.xpose.msra.mxu0 0.0
      %819 = vmatprep.subr.mxu0 0.0
      %820 = vmatpush1.xpose.msra.mxu0 0.0
      %821 = vmatprep.subr.mxu0 0.0
      %822 = vmatpush1.xpose.msra.mxu0 0.0
      %823 = vmatprep.subr.mxu0 0.0
      %824 = vmatpush1.xpose.msra.mxu0 0.0
      %825 = vmatprep.subr.mxu0 0.0
      %826 = vmatpush1.xpose.msra.mxu0 0.0
      %827 = vmatprep.subr.mxu0 0.0
      %828 = vmatpush1.xpose.msra.mxu0 0.0
      %829 = vmatprep.subr.mxu0 0.0
      %830 = vmatpush1.xpose.msra.mxu0 0.0
      %831 = vmatprep.subr.mxu0 0.0
      %832 = vmatpush1.xpose.msra.mxu0 0.0
      %833 = vmatprep.subr.mxu0 0.0
      %834 = vmatpush1.xpose.msra.mxu0 0.0
      %835 = vmatprep.subr.mxu0 0.0
      %836 = vmatpush1.xpose.msra.mxu0 0.0
      %837 = vmatprep.subr.mxu0 0.0
      %838 = vmatpush1.xpose.msra.mxu0 0.0
      %839 = vmatprep.subr.mxu0 0.0
      %840 = vmatpush1.xpose.msra.mxu0 0.0
      %841 = vmatprep.subr.mxu0 0.0
      %842 = vmatpush1.xpose.msra.mxu0 0.0
      %843 = vmatprep.subr.mxu0 0.0
      %844 = vmatpush1.xpose.msra.mxu0 0.0
      %845 = vmatprep.subr.mxu0 0.0
      %846 = vmatpush1.xpose.msra.mxu0 0.0
      %847 = vmatprep.subr.mxu0 0.0
      %848 = vmatpush1.xpose.msra.mxu0 0.0
      %849 = vmatprep.subr.mxu0 0.0
      %850 = vmatpush1.xpose.msra.mxu0 0.0
      %851 = vmatprep.subr.mxu0 0.0
      %852 = vmatpush1.xpose.msra.mxu0 0.0
      %853 = vmatprep.subr.mxu0 0.0
      %854 = vmatpush1.xpose.msra.mxu0 0.0
      %855 = vmatprep.mubr.f32.mxu0 0.0
      %856 = vmatmul.mubr.f32.gmra.mrb[0].mxu0 %v738
      %v857 = vpop.f32.mrb[0].mxu0
      %v858 = vadd.f32 0.0, %v857
      %v859 = vpop.f32.mrb[0].mxu0
      %860 = vmatprep.mubr.f32.mxu0 0.0
      %861 = vmatmul.mubr.f32.gmra.mrb[0].mxu0 %v741
      %v862 = vpop.f32.mrb[0].mxu0
      %v863 = vadd.f32 0.0, %v862
      %v864 = vpop.f32.mrb[0].mxu0
      %865 = vmatprep.mubr.f32.mxu0 0.0
      %866 = vmatmul.mubr.f32.gmra.mrb[0].mxu0 %v744
      %v867 = vpop.f32.mrb[0].mxu0
      %v868 = vadd.f32 0.0, %v867
      %v869 = vpop.f32.mrb[0].mxu0
      %870 = vmatprep.mubr.f32.mxu0 0.0
      %871 = vmatmul.mubr.f32.gmra.mrb[0].mxu0 %v747
      %v872 = vpop.f32.mrb[0].mxu0
      %v873 = vadd.f32 0.0, %v872
      %v874 = vpop.f32.mrb[0].mxu0
      %875 = vmatprep.mubr.f32.mxu0 0.0
      %876 = vmatmul.mubr.f32.gmra.mrb[0].mxu0 %v750
      %v877 = vpop.f32.mrb[0].mxu0
      %v878 = vadd.f32 0.0, %v877
      %v879 = vpop.f32.mrb[0].mxu0
      %880 = vmatprep.mubr.f32.mxu0 0.0
      %881 = vmatmul.mubr.f32.gmra.mrb[0].mxu0 %v753
      %v882 = vpop.f32.mrb[0].mxu0
      %v883 = vadd.f32 0.0, %v882
      %v884 = vpop.f32.mrb[0].mxu0
      %885 = vmatprep.mubr.f32.mxu0 0.0
      %886 = vmatmul.mubr.f32.gmra.mrb[0].mxu0 %v756
      %v887 = vpop.f32.mrb[0].mxu0
      %v888 = vadd.f32 0.0, %v887
      %v889 = vpop.f32.mrb[0].mxu0
      %890 = vmatprep.mubr.f32.mxu0 0.0
      %891 = vmatmul.mubr.f32.gmra.mrb[0].mxu0 %v759
      %v892 = vpop.f32.mrb[0].mxu0
      %v893 = vadd.f32 0.0, %v892
      %v894 = vpop.f32.mrb[0].mxu0
      %895 = vmatprep.mubr.f32.mxu0 0.0
      %896 = vmatmul.mubr.f32.gmra.mrb[0].mxu0 %v762
      %v897 = vpop.f32.mrb[0].mxu0
      %v898 = vadd.f32 0.0, %v897
      %v899 = vpop.f32.mrb[0].mxu0
      %900 = vmatprep.mubr.f32.mxu0 0.0
      %901 = vmatmul.mubr.f32.gmra.mrb[0].mxu0 %v765
      %v902 = vpop.f32.mrb[0].mxu0
      %v903 = vadd.f32 0.0, %v902
      %v904 = vpop.f32.mrb[0].mxu0
      %905 = vmatprep.mubr.f32.mxu0 0.0
      %906 = vmatmul.mubr.f32.gmra.mrb[0].mxu0 %v768
      %v907 = vpop.f32.mrb[0].mxu0
      %v908 = vadd.f32 0.0, %v907
      %v909 = vpop.f32.mrb[0].mxu0
      %910 = vmatprep.mubr.f32.mxu0 0.0
      %911 = vmatmul.mubr.f32.gmra.mrb[0].mxu0 %v771
      %v912 = vpop.f32.mrb[0].mxu0
      %v913 = vadd.f32 0.0, %v912
      %v914 = vpop.f32.mrb[0].mxu0
      %915 = vmatprep.mubr.f32.mxu0 0.0
      %916 = vmatmul.mubr.f32.gmra.mrb[0].mxu0 %v774
      %v917 = vpop.f32.mrb[0].mxu0
      %v918 = vadd.f32 0.0, %v917
      %v919 = vpop.f32.mrb[0].mxu0
      %920 = vmatprep.mubr.f32.mxu0 0.0
      %921 = vmatmul.mubr.f32.gmra.mrb[0].mxu0 %v777
      %v922 = vpop.f32.mrb[0].mxu0
      %v923 = vadd.f32 0.0, %v922
      %v924 = vpop.f32.mrb[0].mxu0
      %925 = vmatprep.mubr.f32.mxu0 0.0
      %926 = vmatmul.mubr.f32.gmra.mrb[0].mxu0 %v780
      %v927 = vpop.f32.mrb[0].mxu0
      %v928 = vadd.f32 0.0, %v927
      %v929 = vpop.f32.mrb[0].mxu0
      %930 = vmatprep.mubr.f32.mxu0 0.0
      %931 = vmatmul.mubr.f32.gmra.mrb[0].mxu0 %v783
      %v932 = vpop.f32.mrb[0].mxu0
      %v933 = vadd.f32 0.0, %v932
      %v934 = vpop.f32.mrb[0].mxu0
      %935 = vdwg.mxu0
      %v936 = vld [vmem:[%s3] sm:$0xff]
      %v937 = vld [vmem:[%s3 + $0x8] sm:$0xff]
      %v938 = vld [vmem:[%s3 + $0x10] sm:$0xff]
      %v939 = vld [vmem:[%s3 + $0x18] sm:$0xff]
      %v940 = vld [vmem:[%s3 + $0x20] sm:$0xff]
      %v941 = vld [vmem:[%s3 + $0x28] sm:$0xff]
      %v942 = vld [vmem:[%s3 + $0x30] sm:$0xff]
      %v943 = vld [vmem:[%s3 + $0x38] sm:$0xff]
      %v944 = vld [vmem:[%s3 + $0x40] sm:$0xff]
      %v945 = vld [vmem:[%s3 + $0x48] sm:$0xff]
      %v946 = vld [vmem:[%s3 + $0x50] sm:$0xff]
      %v947 = vld [vmem:[%s3 + $0x58] sm:$0xff]
      %v948 = vld [vmem:[%s3 + $0x60] sm:$0xff]
      %v949 = vld [vmem:[%s3 + $0x68] sm:$0xff]
      %v950 = vld [vmem:[%s3 + $0x70] sm:$0xff]
      %v951 = vld [vmem:[%s3 + $0x78] sm:$0xff]
      %952 = vmatprep.subr.mxu0 0.0
      %953 = vmatpush1.msra.mxu0 %v559
      %954 = vmatprep.subr.mxu0 0.0
      %955 = vmatpush1.msra.mxu0 %v560
      %956 = vmatprep.subr.mxu0 0.0
      %957 = vmatpush1.msra.mxu0 %v561
      %958 = vmatprep.subr.mxu0 0.0
      %959 = vmatpush1.msra.mxu0 %v562
      %960 = vmatprep.subr.mxu0 0.0
      %961 = vmatpush1.msra.mxu0 %v563
      %962 = vmatprep.subr.mxu0 0.0
      %963 = vmatpush1.msra.mxu0 %v564
      %964 = vmatprep.subr.mxu0 0.0
      %965 = vmatpush1.msra.mxu0 %v565
      %966 = vmatprep.subr.mxu0 0.0
      %967 = vmatpush1.msra.mxu0 %v566
      %968 = vmatprep.subr.mxu0 0.0
      %969 = vmatpush1.msra.mxu0 %v567
      %970 = vmatprep.subr.mxu0 0.0
      %971 = vmatpush1.msra.mxu0 %v568
      %972 = vmatprep.subr.mxu0 0.0
      %973 = vmatpush1.msra.mxu0 %v569
      %974 = vmatprep.subr.mxu0 0.0
      %975 = vmatpush1.msra.mxu0 %v570
      %976 = vmatprep.subr.mxu0 0.0
      %977 = vmatpush1.msra.mxu0 %v571
      %978 = vmatprep.subr.mxu0 0.0
      %979 = vmatpush1.msra.mxu0 %v572
      %980 = vmatprep.subr.mxu0 0.0
      %981 = vmatpush1.msra.mxu0 %v573
      %982 = vmatprep.subr.mxu0 0.0
      %983 = vmatpush1.msra.mxu0 %v574
      %984 = vmatprep.subr.mxu0 0.0
      %985 = vmatpush1.msra.mxu0 0.0
      %986 = vmatprep.subr.mxu0 0.0
      %987 = vmatpush1.msra.mxu0 0.0
      %988 = vmatprep.subr.mxu0 0.0
      %989 = vmatpush1.msra.mxu0 0.0
      %990 = vmatprep.subr.mxu0 0.0
      %991 = vmatpush1.msra.mxu0 0.0
      %992 = vmatprep.subr.mxu0 0.0
      %993 = vmatpush1.msra.mxu0 0.0
      %994 = vmatprep.subr.mxu0 0.0
      %995 = vmatpush1.msra.mxu0 0.0
      %996 = vmatprep.subr.mxu0 0.0
      %997 = vmatpush1.msra.mxu0 0.0
      %998 = vmatprep.subr.mxu0 0.0
      %999 = vmatpush1.msra.mxu0 0.0
      %1000 = vmatprep.subr.mxu0 0.0
      %1001 = vmatpush1.msra.mxu0 0.0
      %1002 = vmatprep.subr.mxu0 0.0
      %1003 = vmatpush1.msra.mxu0 0.0
      %1004 = vmatprep.subr.mxu0 0.0
      %1005 = vmatpush1.msra.mxu0 0.0
      %1006 = vmatprep.subr.mxu0 0.0
      %1007 = vmatpush1.msra.mxu0 0.0
      %1008 = vmatprep.subr.mxu0 0.0
      %1009 = vmatpush1.msra.mxu0 0.0
      %1010 = vmatprep.subr.mxu0 0.0
      %1011 = vmatpush1.msra.mxu0 0.0
      %1012 = vmatprep.subr.mxu0 0.0
      %1013 = vmatpush1.msra.mxu0 0.0
      %1014 = vmatprep.subr.mxu0 0.0
      %1015 = vmatpush1.msra.mxu0 0.0
      %1016 = vmatprep.mubr.f32.mxu0 0.0
      %1017 = vmatmul.mubr.f32.gmra.mrb[0].mxu0 %v936
      %v1018 = vpop.f32.mrb[0].mxu0
      %v1019 = vadd.f32 %v858, %v1018
      %v1020 = vpop.f32.mrb[0].mxu0
      %1021 = vmatprep.mubr.f32.mxu0 0.0
      %1022 = vmatmul.mubr.f32.gmra.mrb[0].mxu0 %v937
      %v1023 = vpop.f32.mrb[0].mxu0
      %v1024 = vadd.f32 %v863, %v1023
      %v1025 = vpop.f32.mrb[0].mxu0
      %1026 = vmatprep.mubr.f32.mxu0 0.0
      %1027 = vmatmul.mubr.f32.gmra.mrb[0].mxu0 %v938
      %v1028 = vpop.f32.mrb[0].mxu0
      %v1029 = vadd.f32 %v868, %v1028
      %v1030 = vpop.f32.mrb[0].mxu0
      %1031 = vmatprep.mubr.f32.mxu0 0.0
      %1032 = vmatmul.mubr.f32.gmra.mrb[0].mxu0 %v939
      %v1033 = vpop.f32.mrb[0].mxu0
      %v1034 = vadd.f32 %v873, %v1033
      %v1035 = vpop.f32.mrb[0].mxu0
      %1036 = vmatprep.mubr.f32.mxu0 0.0
      %1037 = vmatmul.mubr.f32.gmra.mrb[0].mxu0 %v940
      %v1038 = vpop.f32.mrb[0].mxu0
      %v1039 = vadd.f32 %v878, %v1038
      %v1040 = vpop.f32.mrb[0].mxu0
      %1041 = vmatprep.mubr.f32.mxu0 0.0
      %1042 = vmatmul.mubr.f32.gmra.mrb[0].mxu0 %v941
      %v1043 = vpop.f32.mrb[0].mxu0
      %v1044 = vadd.f32 %v883, %v1043
      %v1045 = vpop.f32.mrb[0].mxu0
      %1046 = vmatprep.mubr.f32.mxu0 0.0
      %1047 = vmatmul.mubr.f32.gmra.mrb[0].mxu0 %v942
      %v1048 = vpop.f32.mrb[0].mxu0
      %v1049 = vadd.f32 %v888, %v1048
      %v1050 = vpop.f32.mrb[0].mxu0
      %1051 = vmatprep.mubr.f32.mxu0 0.0
      %1052 = vmatmul.mubr.f32.gmra.mrb[0].mxu0 %v943
      %v1053 = vpop.f32.mrb[0].mxu0
      %v1054 = vadd.f32 %v893, %v1053
      %v1055 = vpop.f32.mrb[0].mxu0
      %1056 = vmatprep.mubr.f32.mxu0 0.0
      %1057 = vmatmul.mubr.f32.gmra.mrb[0].mxu0 %v944
      %v1058 = vpop.f32.mrb[0].mxu0
      %v1059 = vadd.f32 %v898, %v1058
      %v1060 = vpop.f32.mrb[0].mxu0
      %1061 = vmatprep.mubr.f32.mxu0 0.0
      %1062 = vmatmul.mubr.f32.gmra.mrb[0].mxu0 %v945
      %v1063 = vpop.f32.mrb[0].mxu0
      %v1064 = vadd.f32 %v903, %v1063
      %v1065 = vpop.f32.mrb[0].mxu0
      %1066 = vmatprep.mubr.f32.mxu0 0.0
      %1067 = vmatmul.mubr.f32.gmra.mrb[0].mxu0 %v946
      %v1068 = vpop.f32.mrb[0].mxu0
      %v1069 = vadd.f32 %v908, %v1068
      %v1070 = vpop.f32.mrb[0].mxu0
      %1071 = vmatprep.mubr.f32.mxu0 0.0
      %1072 = vmatmul.mubr.f32.gmra.mrb[0].mxu0 %v947
      %v1073 = vpop.f32.mrb[0].mxu0
      %v1074 = vadd.f32 %v913, %v1073
      %v1075 = vpop.f32.mrb[0].mxu0
      %1076 = vmatprep.mubr.f32.mxu0 0.0
      %1077 = vmatmul.mubr.f32.gmra.mrb[0].mxu0 %v948
      %v1078 = vpop.f32.mrb[0].mxu0
      %v1079 = vadd.f32 %v918, %v1078
      %v1080 = vpop.f32.mrb[0].mxu0
      %1081 = vmatprep.mubr.f32.mxu0 0.0
      %1082 = vmatmul.mubr.f32.gmra.mrb[0].mxu0 %v949
      %v1083 = vpop.f32.mrb[0].mxu0
      %v1084 = vadd.f32 %v923, %v1083
      %v1085 = vpop.f32.mrb[0].mxu0
      %1086 = vmatprep.mubr.f32.mxu0 0.0
      %1087 = vmatmul.mubr.f32.gmra.mrb[0].mxu0 %v950
      %v1088 = vpop.f32.mrb[0].mxu0
      %v1089 = vadd.f32 %v928, %v1088
      %v1090 = vpop.f32.mrb[0].mxu0
      %1091 = vmatprep.mubr.f32.mxu0 0.0
      %1092 = vmatmul.mubr.f32.gmra.mrb[0].mxu0 %v951
      %v1093 = vpop.f32.mrb[0].mxu0
      %v1094 = vadd.f32 %v933, %v1093
      %v1095 = vpop.f32.mrb[0].mxu0
      %1096 = vdwg.mxu0
      %vm1097 = vcmask 130048
      %1098 = vst.msk [vmem:[%s248] sm:$0xff] %vm1097, %v1019
      %1099 = vst.msk [vmem:[%s248 + $0x8] sm:$0xff] %vm1097, %v1024
      %1100 = vst.msk [vmem:[%s248 + $0x10] sm:$0xff] %vm1097, %v1029
      %1101 = vst.msk [vmem:[%s248 + $0x18] sm:$0xff] %vm1097, %v1034
      %1102 = vst.msk [vmem:[%s248 + $0x20] sm:$0xff] %vm1097, %v1039
      %1103 = vst.msk [vmem:[%s248 + $0x28] sm:$0xff] %vm1097, %v1044
      %1104 = vst.msk [vmem:[%s248 + $0x30] sm:$0xff] %vm1097, %v1049
      %1105 = vst.msk [vmem:[%s248 + $0x38] sm:$0xff] %vm1097, %v1054
      %1106 = vst.msk [vmem:[%s248 + $0x40] sm:$0xff] %vm1097, %v1059
      %1107 = vst.msk [vmem:[%s248 + $0x48] sm:$0xff] %vm1097, %v1064
      %1108 = vst.msk [vmem:[%s248 + $0x50] sm:$0xff] %vm1097, %v1069
      %1109 = vst.msk [vmem:[%s248 + $0x58] sm:$0xff] %vm1097, %v1074
      %1110 = vst.msk [vmem:[%s248 + $0x60] sm:$0xff] %vm1097, %v1079
      %1111 = vst.msk [vmem:[%s248 + $0x68] sm:$0xff] %vm1097, %v1084
      %1112 = vst.msk [vmem:[%s248 + $0x70] sm:$0xff] %vm1097, %v1089
      %1113 = vst.msk [vmem:[%s248 + $0x78] sm:$0xff] %vm1097, %v1094
      %p1114 = scmp.lt.s32.totalorder %s19, 1
      %s1115 = scalar_select %p1114, %s19, 1
      %p1116 = scmp.lt.s32.totalorder %s20, 0
      %s1117 = scalar_select %p1116, %s20, 0
      %s1118 = smul.addr %s1115, 16
      %s1119 = sadd.s32 %s1117, %s1118
      %s1120 = smul.addr %s1119, 8
      %s1121 = scalar_lea.vmem %s4, %s1120
      // Predicated region
      $region41: #{tpu_custom_call.1} parent=35 // pred_check
        %p1122 = pneg %p143
      $region42: #{tpu_custom_call.1} parent=35 // pred_check_branch
        %1124 = sbr.rel (%p1122) target = $region44
      $region43: #{tpu_custom_call.1} parent=35 // pred_region
        _
      $region44: #{tpu_custom_call.1} parent=35 // pred_fallthru
        _
    $region36: #{tpu_custom_call.1} parent=5 // pred_fallthru
      _
    %p1125 = scmp.le.s32.totalorder 2, %s10
    // Predicated region
    $region45: #{tpu_custom_call.1} parent=5 // pred_check
      %p1126 = pneg %p1125
    $region46: #{tpu_custom_call.1} parent=5 // pred_check_branch
      %1128 = sbr.rel (%p1126) target = $region48
    $region47: #{tpu_custom_call.1} parent=5 // pred_region
      %s1129 = ssub.s32 %s10, 2
      // Predicated region
      $region49: #{tpu_custom_call.1} parent=47 // pred_check
        %p1130 = pneg %p149
      $region50: #{tpu_custom_call.1} parent=47 // pred_check_branch
        %1132 = sbr.rel (%p1130) target = $region52
      $region51: #{tpu_custom_call.1} parent=47 // pred_region
        %p1133 = scmp.lt.s32.totalorder %s21, 1
        %s1134 = scalar_select %p1133, %s21, 1
        %p1135 = scmp.lt.s32.totalorder %s22, 0
        %s1136 = scalar_select %p1135, %s22, 0
        %s1137 = smul.addr %s1134, 16
        %s1138 = sadd.s32 %s1136, %s1137
        %s1139 = smul.addr %s1138, 8
        %s1140 = scalar_lea.vmem %s4, %s1139
      $region52: #{tpu_custom_call.1} parent=47 // pred_fallthru
        _
    $region48: #{tpu_custom_call.1} parent=5 // pred_fallthru
      _
  $region6: #{tpu_custom_call.1} parent=0 // loop_footer
    %s14 = sadd.s32 1, %s10
  $region7: #{tpu_custom_call.1} parent=0 // loop_footer_branch
    %9 = sbr.rel target = $region3
  $region8: #{tpu_custom_call.1} parent=0 // loop_exit
    _

</llo_original>
